<compile_context>
chip_gen: v7x
topology: tpu7x:2x2x1
jax: 0.10.0
libtpu: 0.0.40
codegen_flags: <defaults>
</compile_context>

<pallas_src>
import functools

import jax
import jax.numpy as jnp
from jax.experimental import pallas as pl
from jax.experimental.pallas import tpu as pltpu


def _round_up(n, m):
    return ((n + m - 1) // m) * m


def _make_node_kernel(num_layers):
    """Kernel for an MLP with `num_layers` Linear->ReLU layers.

    x_ref : [TILE_B, D_pad]            activation tile (compute dtype)
    w_ref : [L, D_pad, D_pad]          zero-padded weight stack (compute dtype)
    b_ref : [L, 1, D_pad]              zero-padded bias stack (f32)
    out   : [TILE_B, D_pad]            lane-dense output tile
    """

    def kernel(x_ref, w_ref, b_ref, out_ref):
        h = x_ref[...]
        for l in range(num_layers):  # unrolled: static MXU/VPU schedule
            acc = jnp.dot(h, w_ref[l], preferred_element_type=jnp.float32)
            acc = jnp.maximum(acc + b_ref[l], 0.0)  # bias + ReLU in f32
            # cast back to compute dtype for the next MXU push; keep the last
            # layer's f32 accumulator for the store.
            h = acc if l == num_layers - 1 else acc.astype(w_ref.dtype)
        out_ref[...] = h.astype(out_ref.dtype)

    return kernel


@functools.partial(jax.jit, static_argnames=("compute_dtype", "tile_b"))
def black_box_node_forward(x, u, weights, biases, *,
                           compute_dtype=jnp.float32, tile_b=128):
    """Pallas forward of BlackBoxNODE.

    x: [B, dx], u: [B, du]; weights[i]: [in_i, out_i] (PyTorch Linear weight
    transposed); biases[i]: [out_i]; weights[0] has in_0 == dx + du.
    """
    num_layers = len(weights)
    batch = x.shape[0]
    out_dim = weights[-1].shape[-1]

    # Common lane-dense width for all layers (padding is zeros, so padded
    # features stay exactly 0 through matmul/bias/ReLU).
    dims = [weights[0].shape[0]] + [w.shape[-1] for w in weights]
    d_pad = _round_up(max(dims), 128)

    # Pack parameters into two contiguous stacked buffers (2 DMAs, not 2*L).
    w_stack = jnp.stack(
        [jnp.pad(w, ((0, d_pad - w.shape[0]), (0, d_pad - w.shape[1])))
         for w in weights]
    ).astype(compute_dtype)
    b_stack = jnp.stack(
        [jnp.pad(b, (0, d_pad - b.shape[0])).reshape(1, -1) for b in biases]
    ).astype(jnp.float32)

    # Fuse the concat here -> single K-aligned matmul for layer 0 in-kernel.
    h0 = jnp.concatenate([x, u], axis=-1)

    # Batch tiling (second-to-last block dim must be a multiple of 8).
    tb = min(tile_b, _round_up(batch, 8))
    padded_batch = _round_up(batch, tb)
    h0 = jnp.pad(h0, ((0, padded_batch - batch), (0, d_pad - h0.shape[-1])))
    h0 = h0.astype(compute_dtype)

    grid = (padded_batch // tb,)
    kernel = _make_node_kernel(num_layers)

    out = pl.pallas_call(
        kernel,
        out_shape=jax.ShapeDtypeStruct((padded_batch, d_pad), x.dtype),
        grid=grid,
        in_specs=[
            # Activation tile marches over the batch.
            pl.BlockSpec((tb, d_pad), lambda i: (i, 0)),
            # Constant index_maps: weights/biases DMA'd once, VMEM-resident
            # across all grid steps.
            pl.BlockSpec((num_layers, d_pad, d_pad), lambda i: (0, 0, 0)),
            pl.BlockSpec((num_layers, 1, d_pad), lambda i: (0, 0, 0)),
        ],
        out_specs=pl.BlockSpec((tb, d_pad), lambda i: (i, 0)),
        compiler_params=pltpu.CompilerParams(
            # Batch tiles are independent -> shard across TensorCores on v7x.
            dimension_semantics=("parallel",),
        ),
    )(h0, w_stack, b_stack)

    # Slice away batch padding and the lane padding of the last layer.
    return out[:batch, :out_dim]


def _init_params(key, hidden_dims):
    """Deterministic PyTorch-Linear-style init (uniform +/- 1/sqrt(fan_in))."""
    weights, biases = [], []
    for i in range(len(hidden_dims) - 1):
        fan_in, fan_out = hidden_dims[i], hidden_dims[i + 1]
        key, kw, kb = jax.random.split(key, 3)
        bound = 1.0 / jnp.sqrt(fan_in)
        # stored as [in, out] (transposed w.r.t. PyTorch's [out, in])
        w = jax.random.uniform(kw, (fan_in, fan_out), jnp.float32, -bound, bound)
        b = jax.random.uniform(kb, (fan_out,), jnp.float32, -bound, bound)
        weights.append(w)
        biases.append(b)
    return weights, biases


def _reference_forward(x, u, weights, biases, compute_dtype=jnp.float32):
    """Pure-JAX reference mirroring the kernel's dtype strategy."""
    h = jnp.concatenate([x, u], axis=-1).astype(compute_dtype)
    last = len(weights) - 1
    for i, (w, b) in enumerate(zip(weights, biases)):
        acc = jnp.dot(h, w.astype(compute_dtype),
                      preferred_element_type=jnp.float32) + b
        acc = jnp.maximum(acc, 0.0)
        h = acc if i == last else acc.astype(compute_dtype)
    return h.astype(x.dtype)


if __name__ == "__main__":
    # hidden_dims for build_mlp: input = dx + du
    params = [32, 64, 64, 16]
    dx, du = 24, 8
    batch = 256  # tiled as 2 grid steps of TILE_B=128

    key = jax.random.PRNGKey(0)
    key, kx, ku, kp = jax.random.split(key, 4)
    x = jax.random.normal(kx, (batch, dx), jnp.float32)
    u = jax.random.normal(ku, (batch, du), jnp.float32)
    weights, biases = _init_params(kp, params)

    # f32 path (tight correctness check).
    out = black_box_node_forward(x, u, weights, biases,
                                 compute_dtype=jnp.float32, tile_b=128)
    out = jax.block_until_ready(out)
    ref = _reference_forward(x, u, weights, biases)
    assert out.shape == (batch, params[-1]), out.shape
    assert jnp.allclose(out, ref, atol=1e-4, rtol=1e-4), "f32 mismatch vs reference"

    # bf16-operand / f32-accumulation path (MXU-native), checked against a
    # reference that applies the same casting.
    out_bf16 = black_box_node_forward(x, u, weights, biases,
                                      compute_dtype=jnp.bfloat16, tile_b=128)
    out_bf16 = jax.block_until_ready(out_bf16)
    ref_bf16 = _reference_forward(x, u, weights, biases,
                                  compute_dtype=jnp.bfloat16)
    assert out_bf16.shape == (batch, params[-1]), out_bf16.shape
    assert jnp.allclose(out_bf16, ref_bf16, atol=5e-2, rtol=5e-2), \
        "bf16 mismatch vs reference"

    print("KERNEL_OK")
</pallas_src>

<mosaic_0001>
module attributes {stable_mosaic.version = 11 : i64} {
  func.func @kernel(%arg0: i32, %arg1: memref<128x128xf32, #tpu.memory_space<vmem>>, %arg2: memref<3x128x128xf32, #tpu.memory_space<vmem>>, %arg3: memref<3x1x128xf32, #tpu.memory_space<vmem>>, %arg4: memref<128x128xf32, #tpu.memory_space<vmem>>) attributes {dimension_semantics = [#tpu.dimension_semantics<parallel>], iteration_bounds = array<i64: 2>, scalar_prefetch = 0 : i64, scratch_operands = 0 : i64, tpu.core_type = #tpu.core_type<tc>, window_params = [{transform_indices = @transform_0, window_bounds = array<i64: 128, 128>}, {pipeline_mode = #tpu.pipeline_mode<synchronous>, transform_indices = @transform_1, window_bounds = array<i64: 3, 128, 128>}, {pipeline_mode = #tpu.pipeline_mode<synchronous>, transform_indices = @transform_2, window_bounds = array<i64: 3, 1, 128>}, {transform_indices = @transform_3, window_bounds = array<i64: 128, 128>}]} {
    %c0 = arith.constant 0 : index
    %c0_0 = arith.constant 0 : index
    %0 = vector.load %arg1[%c0, %c0_0] : memref<128x128xf32, #tpu.memory_space<vmem>>, vector<128x128xf32>
    %c0_1 = arith.constant 0 : index
    %c0_2 = arith.constant 0 : index
    %c0_3 = arith.constant 0 : index
    %1 = vector.load %arg2[%c0_1, %c0_2, %c0_3] : memref<3x128x128xf32, #tpu.memory_space<vmem>>, vector<1x128x128xf32>
    %2 = vector.shape_cast %1 : vector<1x128x128xf32> to vector<128x128xf32>
    %cst = arith.constant dense<0.000000e+00> : vector<128x128xf32>
    %3 = tpu.matmul %0, %2, %cst {dimension_numbers = #tpu.dot_dimension_numbers<[1], [0], [0], [1], [0, 0, 1, 1], [], []>} : vector<128x128xf32>, vector<128x128xf32>, vector<128x128xf32> -> vector<128x128xf32>
    %c0_4 = arith.constant 0 : index
    %c0_5 = arith.constant 0 : index
    %c0_6 = arith.constant 0 : index
    %4 = vector.load %arg3[%c0_4, %c0_5, %c0_6] : memref<3x1x128xf32, #tpu.memory_space<vmem>>, vector<1x1x128xf32>
    %5 = vector.shape_cast %4 : vector<1x1x128xf32> to vector<1x128xf32>
    %6 = vector.broadcast %5 : vector<1x128xf32> to vector<128x128xf32>
    %7 = arith.addf %3, %6 : vector<128x128xf32>
    %cst_7 = arith.constant 0.000000e+00 : f32
    %8 = vector.broadcast %cst_7 : f32 to vector<128x128xf32>
    %9 = arith.maximumf %7, %8 : vector<128x128xf32>
    %c1 = arith.constant 1 : index
    %c0_8 = arith.constant 0 : index
    %c0_9 = arith.constant 0 : index
    %10 = vector.load %arg2[%c1, %c0_8, %c0_9] : memref<3x128x128xf32, #tpu.memory_space<vmem>>, vector<1x128x128xf32>
    %11 = vector.shape_cast %10 : vector<1x128x128xf32> to vector<128x128xf32>
    %cst_10 = arith.constant dense<0.000000e+00> : vector<128x128xf32>
    %12 = tpu.matmul %9, %11, %cst_10 {dimension_numbers = #tpu.dot_dimension_numbers<[1], [0], [0], [1], [0, 0, 1, 1], [], []>} : vector<128x128xf32>, vector<128x128xf32>, vector<128x128xf32> -> vector<128x128xf32>
    %c1_11 = arith.constant 1 : index
    %c0_12 = arith.constant 0 : index
    %c0_13 = arith.constant 0 : index
    %13 = vector.load %arg3[%c1_11, %c0_12, %c0_13] : memref<3x1x128xf32, #tpu.memory_space<vmem>>, vector<1x1x128xf32>
    %14 = vector.shape_cast %13 : vector<1x1x128xf32> to vector<1x128xf32>
    %15 = vector.broadcast %14 : vector<1x128xf32> to vector<128x128xf32>
    %16 = arith.addf %12, %15 : vector<128x128xf32>
    %cst_14 = arith.constant 0.000000e+00 : f32
    %17 = vector.broadcast %cst_14 : f32 to vector<128x128xf32>
    %18 = arith.maximumf %16, %17 : vector<128x128xf32>
    %c2 = arith.constant 2 : index
    %c0_15 = arith.constant 0 : index
    %c0_16 = arith.constant 0 : index
    %19 = vector.load %arg2[%c2, %c0_15, %c0_16] : memref<3x128x128xf32, #tpu.memory_space<vmem>>, vector<1x128x128xf32>
    %20 = vector.shape_cast %19 : vector<1x128x128xf32> to vector<128x128xf32>
    %cst_17 = arith.constant dense<0.000000e+00> : vector<128x128xf32>
    %21 = tpu.matmul %18, %20, %cst_17 {dimension_numbers = #tpu.dot_dimension_numbers<[1], [0], [0], [1], [0, 0, 1, 1], [], []>} : vector<128x128xf32>, vector<128x128xf32>, vector<128x128xf32> -> vector<128x128xf32>
    %c2_18 = arith.constant 2 : index
    %c0_19 = arith.constant 0 : index
    %c0_20 = arith.constant 0 : index
    %22 = vector.load %arg3[%c2_18, %c0_19, %c0_20] : memref<3x1x128xf32, #tpu.memory_space<vmem>>, vector<1x1x128xf32>
    %23 = vector.shape_cast %22 : vector<1x1x128xf32> to vector<1x128xf32>
    %24 = vector.broadcast %23 : vector<1x128xf32> to vector<128x128xf32>
    %25 = arith.addf %21, %24 : vector<128x128xf32>
    %cst_21 = arith.constant 0.000000e+00 : f32
    %26 = vector.broadcast %cst_21 : f32 to vector<128x128xf32>
    %27 = arith.maximumf %25, %26 : vector<128x128xf32>
    %c0_22 = arith.constant 0 : index
    %c0_23 = arith.constant 0 : index
    %28 = vector.load %arg4[%c0_22, %c0_23] : memref<128x128xf32, #tpu.memory_space<vmem>>, vector<128x128xf32>
    tpu.vector_store %arg4[%c0_22, %c0_23], %27 {strides = array<i32>} : memref<128x128xf32, #tpu.memory_space<vmem>>, vector<128x128xf32>,
    return
  }
  func.func @transform_0(%arg0: i32) -> (i32, i32) {
    %c0_i32 = arith.constant 0 : i32
    %c0_i32_0 = arith.constant 0 : i32
    return %arg0, %c0_i32 : i32, i32
  }
  func.func @transform_1(%arg0: i32) -> (i32, i32, i32) {
    %c0_i32 = arith.constant 0 : i32
    %c0_i32_0 = arith.constant 0 : i32
    %c0_i32_1 = arith.constant 0 : i32
    %c0_i32_2 = arith.constant 0 : i32
    return %c0_i32, %c0_i32_0, %c0_i32_1 : i32, i32, i32
  }
  func.func @transform_2(%arg0: i32) -> (i32, i32, i32) {
    %c0_i32 = arith.constant 0 : i32
    %c0_i32_0 = arith.constant 0 : i32
    %c0_i32_1 = arith.constant 0 : i32
    %c0_i32_2 = arith.constant 0 : i32
    return %c0_i32, %c0_i32_0, %c0_i32_1 : i32, i32, i32
  }
  func.func @transform_3(%arg0: i32) -> (i32, i32) {
    %c0_i32 = arith.constant 0 : i32
    %c0_i32_0 = arith.constant 0 : i32
    return %arg0, %c0_i32 : i32, i32
  }
}

</mosaic_0001>

<llo_original>
// kernel: black_box_node_forward.1
$region0: #{black_box_node_forward.1}
  #allocation0 [shape = 'u32[]', space=smem, size = 0x4, offset = 0x4, fixed_abs, tag = 'smem constant byte address 0x4 - core index']
  #allocation1 [shape = 'u32[144,128]{1,0:T(1,128)}', space=vmem, size = 0x12000, scoped, tag = 'internal scratch']
  %s0 = inlined_call_operand.vmem [shape: f32[256,128], index: 0, kind: input, shape index: {}]
  %s1 = inlined_call_operand.vmem [shape: f32[3,128,128], index: 1, kind: input, shape index: {}]
  %s2 = inlined_call_operand.vmem [shape: f32[3,1,128], index: 2, kind: input, shape index: {}]
  %s3 = inlined_call_operand.vmem [shape: f32[256,128], index: 3, kind: output, shape index: {}]
  %s4 = sld [smem:[#allocation0]]
  $region45: #{black_box_node_forward.1} parent=0
    _
  %s6 = ssub.s32 1, %s4
  %s7 = scalar_select 0, %s6, %s4
  loop: start=0, step=1, limit=4
  $region2: #{black_box_node_forward.1} parent=0 // loop_pre_header
    _
  $region3: #{black_box_node_forward.1} parent=0 // loop_header
    %s9 = sphi 0, %s13
    %p10 = scmp.ge.s32.totalorder %s9, 4
    %s19 = sphi 0, %s21
    %s22 = sphi 0, %s19
    %s23 = sphi 0, %s22
    %s39 = sphi 0, %s23
    %s43 = sphi 0, %s43
    %s45 = sphi 0, %s43
    %s46 = sphi 0, %s45
    %s60 = sphi 0, %s46
    %s64 = sphi 0, %s64
    %s66 = sphi 0, %s64
    %s67 = sphi 0, %s66
    %s81 = sphi 0, %s67
    %s87 = sphi 0, %s89
    %s90 = sphi 0, %s87
    %s91 = sphi 0, %s90
    %s107 = sphi 0, %s91
  $region4: #{black_box_node_forward.1} parent=0 // loop_header_branch
    %12 = sbr.rel (%p10) target = $region8
  $region5: #{black_box_node_forward.1} parent=0 // loop_body
    %s14 = ssub.s32 %s9, 1
    %s15 = ssub.s32 %s9, 2
    %s16 = sadd.s32 %s9, 1
    %s17 = ssub.s32 %s9, %s16
    %p18 = scmp.eq.s32.totalorder %s17, 0
    %s20 = sadd.s32 %s19, 1
    %s21 = scalar_select %p18, %s19, %s20
    %p24 = pneg %p18
    %p25 = scmp.eq.s32.totalorder %s9, 1
    %p26 = por %p24, %p25
    %p27 = scmp.ne.s32.totalorder %s19, %s22
    %p28 = scmp.eq.s32.totalorder %s9, 0
    %p29 = por %p27, %p28
    %p30 = scmp.ne.s32.totalorder %s19, %s22
    %p31 = scmp.eq.s32.totalorder %s14, 1
    %p32 = por %p30, %p31
    %p33 = scmp.ne.s32.totalorder %s22, %s23
    %p34 = scmp.eq.s32.totalorder %s14, 0
    %p35 = por %p33, %p34
    %p36 = scmp.ne.s32.totalorder %s22, %s23
    %p37 = scmp.eq.s32.totalorder %s15, 1
    %p38 = por %p36, %p37
    %p40 = scmp.ne.s32.totalorder %s23, %s39
    %p41 = scmp.eq.s32.totalorder %s15, 0
    %p42 = por %p40, %p41
    %s44 = sadd.s32 %s43, 1
    %p47 = scmp.eq.s32.totalorder %s9, 1
    %p48 = scmp.ne.s32.totalorder %s43, %s45
    %p49 = scmp.eq.s32.totalorder %s9, 0
    %p50 = por %p48, %p49
    %p51 = scmp.ne.s32.totalorder %s43, %s45
    %p52 = scmp.eq.s32.totalorder %s14, 1
    %p53 = por %p51, %p52
    %p54 = scmp.ne.s32.totalorder %s45, %s46
    %p55 = scmp.eq.s32.totalorder %s14, 0
    %p56 = por %p54, %p55
    %p57 = scmp.ne.s32.totalorder %s45, %s46
    %p58 = scmp.eq.s32.totalorder %s15, 1
    %p59 = por %p57, %p58
    %p61 = scmp.ne.s32.totalorder %s46, %s60
    %p62 = scmp.eq.s32.totalorder %s15, 0
    %p63 = por %p61, %p62
    %s65 = sadd.s32 %s64, 1
    %p68 = scmp.eq.s32.totalorder %s9, 1
    %p69 = scmp.ne.s32.totalorder %s64, %s66
    %p70 = scmp.eq.s32.totalorder %s9, 0
    %p71 = por %p69, %p70
    %p72 = scmp.ne.s32.totalorder %s64, %s66
    %p73 = scmp.eq.s32.totalorder %s14, 1
    %p74 = por %p72, %p73
    %p75 = scmp.ne.s32.totalorder %s66, %s67
    %p76 = scmp.eq.s32.totalorder %s14, 0
    %p77 = por %p75, %p76
    %p78 = scmp.ne.s32.totalorder %s66, %s67
    %p79 = scmp.eq.s32.totalorder %s15, 1
    %p80 = por %p78, %p79
    %p82 = scmp.ne.s32.totalorder %s67, %s81
    %p83 = scmp.eq.s32.totalorder %s15, 0
    %p84 = por %p82, %p83
    %s85 = ssub.s32 %s9, %s16
    %p86 = scmp.eq.s32.totalorder %s85, 0
    %s88 = sadd.s32 %s87, 1
    %s89 = scalar_select %p86, %s87, %s88
    %p92 = pneg %p86
    %p93 = scmp.eq.s32.totalorder %s9, 1
    %p94 = por %p92, %p93
    %p95 = scmp.ne.s32.totalorder %s87, %s90
    %p96 = scmp.eq.s32.totalorder %s9, 0
    %p97 = por %p95, %p96
    %p98 = scmp.ne.s32.totalorder %s87, %s90
    %p99 = scmp.eq.s32.totalorder %s14, 1
    %p100 = por %p98, %p99
    %p101 = scmp.ne.s32.totalorder %s90, %s91
    %p102 = scmp.eq.s32.totalorder %s14, 0
    %p103 = por %p101, %p102
    %p104 = scmp.ne.s32.totalorder %s90, %s91
    %p105 = scmp.eq.s32.totalorder %s15, 1
    %p106 = por %p104, %p105
    %p108 = scmp.ne.s32.totalorder %s91, %s107
    %p109 = scmp.eq.s32.totalorder %s15, 0
    %p110 = por %p108, %p109
    %p111 = scmp.le.s32.totalorder 1, %s9
    %p112 = scmp.lt.s32.totalorder %s9, 3
    %p113 = pnand %p111, %p112
    %p114 = pneg %p113
    // Predicated region
    $region9: #{black_box_node_forward.1} parent=5 // pred_check
      _
    $region10: #{black_box_node_forward.1} parent=5 // pred_check_branch
      %116 = sbr.rel (%p113) target = $region12
    $region11: #{black_box_node_forward.1} parent=5 // pred_region
      %s117 = ssub.s32 %s9, 1
      // Predicated region
      $region13: #{black_box_node_forward.1} parent=11 // pred_check
        %p118 = pneg %p56
      $region14: #{black_box_node_forward.1} parent=11 // pred_check_branch
        %120 = sbr.rel (%p118) target = $region16
      $region15: #{black_box_node_forward.1} parent=11 // pred_region
        _
      $region16: #{black_box_node_forward.1} parent=11 // pred_fallthru
        _
      // Predicated region
      $region17: #{black_box_node_forward.1} parent=11 // pred_check
        %p121 = pneg %p77
      $region18: #{black_box_node_forward.1} parent=11 // pred_check_branch
        %123 = sbr.rel (%p121) target = $region20
      $region19: #{black_box_node_forward.1} parent=11 // pred_region
        _
      $region20: #{black_box_node_forward.1} parent=11 // pred_fallthru
        _
    $region12: #{black_box_node_forward.1} parent=5 // pred_fallthru
      _
    %p124 = scmp.lt.s32.totalorder %s9, 2
    // Predicated region
    $region21: #{black_box_node_forward.1} parent=5 // pred_check
      %p125 = pneg %p124
    $region22: #{black_box_node_forward.1} parent=5 // pred_check_branch
      %127 = sbr.rel (%p125) target = $region24
    $region23: #{black_box_node_forward.1} parent=5 // pred_region
      // Predicated region
      $region25: #{black_box_node_forward.1} parent=23 // pred_check
        %p128 = pneg %p29
      $region26: #{black_box_node_forward.1} parent=23 // pred_check_branch
        %130 = sbr.rel (%p128) target = $region28
      $region27: #{black_box_node_forward.1} parent=23 // pred_region
        %s131 = smul.u32 16, %s9
        %p132 = scmp.lt.s32.totalorder %s131, 31
        %s133 = scalar_select %p132, %s131, 31
        %s134 = smul.addr %s133, 8
        %s135 = scalar_lea.vmem %s0, %s134
        %s136 = smul.u32 16, %s9
      $region28: #{black_box_node_forward.1} parent=23 // pred_fallthru
        _
    $region24: #{black_box_node_forward.1} parent=5 // pred_fallthru
      _
    %p137 = scmp.le.s32.totalorder 1, %s9
    %p138 = scmp.lt.s32.totalorder %s9, 3
    %p139 = pnand %p137, %p138
    %p140 = pneg %p139
    // Predicated region
    $region29: #{black_box_node_forward.1} parent=5 // pred_check
      _
    $region30: #{black_box_node_forward.1} parent=5 // pred_check_branch
      %142 = sbr.rel (%p139) target = $region32
    $region31: #{black_box_node_forward.1} parent=5 // pred_region
      %s143 = ssub.s32 %s9, 1
      %s144 = smul.u32 16, %s14
      %p145 = scmp.lt.s32.totalorder %s144, 31
      %s146 = scalar_select %p145, %s144, 31
      %s147 = smul.addr %s146, 8
      %s148 = scalar_lea.vmem %s0, %s147
      %p149 = pneg %p35
      %p150 = pneg %p32
      %p151 = pneg %p56
      %p152 = pneg %p53
      %p153 = pneg %p77
      %p154 = pneg %p74
      %p155 = pneg %p103
      %p156 = pneg %p100
      %s157 = smul.u32 16, %s14
      %p158 = scmp.lt.s32.totalorder %s157, 31
      %s159 = scalar_select %p158, %s157, 31
      %s160 = smul.addr %s159, 8
      %s161 = scalar_lea.vmem %s3, %s160
      %s162 = smul.u32 16, %s14
      %p163 = scmp.lt.s32.totalorder %s162, 31
      %s164 = scalar_select %p163, %s162, 31
      %s165 = smul.addr %s164, 8
      %s166 = scalar_lea.vmem %s0, %s165
      %s167 = smul.u32 16, %s14
      %s168 = smul.u32 16, %s14
      %p169 = scmp.lt.s32.totalorder %s168, 31
      %s170 = scalar_select %p169, %s168, 31
      %s171 = smul.addr %s170, 8
      %s172 = scalar_lea.vmem %s3, %s171
      %s173 = smul.u32 16, %s14
      %v174 = vld [vmem:[%s166] sm:$0xff]
      %v175 = vld [vmem:[%s166 + $0x8] sm:$0xff]
      %v176 = vld [vmem:[%s166 + $0x10] sm:$0xff]
      %v177 = vld [vmem:[%s166 + $0x18] sm:$0xff]
      %v178 = vld [vmem:[%s166 + $0x20] sm:$0xff]
      %v179 = vld [vmem:[%s166 + $0x28] sm:$0xff]
      %v180 = vld [vmem:[%s166 + $0x30] sm:$0xff]
      %v181 = vld [vmem:[%s166 + $0x38] sm:$0xff]
      %v182 = vld [vmem:[%s166 + $0x40] sm:$0xff]
      %v183 = vld [vmem:[%s166 + $0x48] sm:$0xff]
      %v184 = vld [vmem:[%s166 + $0x50] sm:$0xff]
      %v185 = vld [vmem:[%s166 + $0x58] sm:$0xff]
      %v186 = vld [vmem:[%s166 + $0x60] sm:$0xff]
      %v187 = vld [vmem:[%s166 + $0x68] sm:$0xff]
      %v188 = vld [vmem:[%s166 + $0x70] sm:$0xff]
      %v189 = vld [vmem:[%s166 + $0x78] sm:$0xff]
      %v190 = vld [vmem:[%s1] sm:$0xff]
      %v191 = vld [vmem:[%s1 + $0x8] sm:$0xff]
      %v192 = vld [vmem:[%s1 + $0x10] sm:$0xff]
      %v193 = vld [vmem:[%s1 + $0x18] sm:$0xff]
      %v194 = vld [vmem:[%s1 + $0x20] sm:$0xff]
      %v195 = vld [vmem:[%s1 + $0x28] sm:$0xff]
      %v196 = vld [vmem:[%s1 + $0x30] sm:$0xff]
      %v197 = vld [vmem:[%s1 + $0x38] sm:$0xff]
      %v198 = vld [vmem:[%s1 + $0x40] sm:$0xff]
      %v199 = vld [vmem:[%s1 + $0x48] sm:$0xff]
      %v200 = vld [vmem:[%s1 + $0x50] sm:$0xff]
      %v201 = vld [vmem:[%s1 + $0x58] sm:$0xff]
      %v202 = vld [vmem:[%s1 + $0x60] sm:$0xff]
      %v203 = vld [vmem:[%s1 + $0x68] sm:$0xff]
      %v204 = vld [vmem:[%s1 + $0x70] sm:$0xff]
      %v205 = vld [vmem:[%s1 + $0x78] sm:$0xff]
      %v206 = vld [vmem:[%s2] sm:$0x1]
      %v208 = vlaneseq
      %v209 = vshrl.u32 %v208, 7
      %v210 = vsub.s32 0, %v209
      %v211 = vrot.slane %v206, %v210
      %213 = vmatprep.subr.mxu0 0.0
      %214 = vmatpush1.msra.mxu0 %v190
      %215 = vmatprep.subr.mxu0 0.0
      %216 = vmatpush1.msra.mxu0 %v191
      %217 = vmatprep.subr.mxu0 0.0
      %218 = vmatpush1.msra.mxu0 %v192
      %219 = vmatprep.subr.mxu0 0.0
      %220 = vmatpush1.msra.mxu0 %v193
      %221 = vmatprep.subr.mxu0 0.0
      %222 = vmatpush1.msra.mxu0 %v194
      %223 = vmatprep.subr.mxu0 0.0
      %224 = vmatpush1.msra.mxu0 %v195
      %225 = vmatprep.subr.mxu0 0.0
      %226 = vmatpush1.msra.mxu0 %v196
      %227 = vmatprep.subr.mxu0 0.0
      %228 = vmatpush1.msra.mxu0 %v197
      %229 = vmatprep.subr.mxu0 0.0
      %230 = vmatpush1.msra.mxu0 %v198
      %231 = vmatprep.subr.mxu0 0.0
      %232 = vmatpush1.msra.mxu0 %v199
      %233 = vmatprep.subr.mxu0 0.0
      %234 = vmatpush1.msra.mxu0 %v200
      %235 = vmatprep.subr.mxu0 0.0
      %236 = vmatpush1.msra.mxu0 %v201
      %237 = vmatprep.subr.mxu0 0.0
      %238 = vmatpush1.msra.mxu0 %v202
      %239 = vmatprep.subr.mxu0 0.0
      %240 = vmatpush1.msra.mxu0 %v203
      %241 = vmatprep.subr.mxu0 0.0
      %242 = vmatpush1.msra.mxu0 %v204
      %243 = vmatprep.subr.mxu0 0.0
      %244 = vmatpush1.msra.mxu0 %v205
      %245 = vmatprep.subr.mxu0 0.0
      %246 = vmatpush1.msra.mxu0 0.0
      %247 = vmatprep.subr.mxu0 0.0
      %248 = vmatpush1.msra.mxu0 0.0
      %249 = vmatprep.subr.mxu0 0.0
      %250 = vmatpush1.msra.mxu0 0.0
      %251 = vmatprep.subr.mxu0 0.0
      %252 = vmatpush1.msra.mxu0 0.0
      %253 = vmatprep.subr.mxu0 0.0
      %254 = vmatpush1.msra.mxu0 0.0
      %255 = vmatprep.subr.mxu0 0.0
      %256 = vmatpush1.msra.mxu0 0.0
      %257 = vmatprep.subr.mxu0 0.0
      %258 = vmatpush1.msra.mxu0 0.0
      %259 = vmatprep.subr.mxu0 0.0
      %260 = vmatpush1.msra.mxu0 0.0
      %261 = vmatprep.subr.mxu0 0.0
      %262 = vmatpush1.msra.mxu0 0.0
      %263 = vmatprep.subr.mxu0 0.0
      %264 = vmatpush1.msra.mxu0 0.0
      %265 = vmatprep.subr.mxu0 0.0
      %266 = vmatpush1.msra.mxu0 0.0
      %267 = vmatprep.subr.mxu0 0.0
      %268 = vmatpush1.msra.mxu0 0.0
      %269 = vmatprep.subr.mxu0 0.0
      %270 = vmatpush1.msra.mxu0 0.0
      %271 = vmatprep.subr.mxu0 0.0
      %272 = vmatpush1.msra.mxu0 0.0
      %273 = vmatprep.subr.mxu0 0.0
      %274 = vmatpush1.msra.mxu0 0.0
      %275 = vmatprep.subr.mxu0 0.0
      %276 = vmatpush1.msra.mxu0 0.0
      %277 = vmatprep.mubr.f32.mxu0 0.0
      %278 = vmatmul.mubr.f32.gmra.mrb[0].mxu0 %v174
      %v279 = vpop.f32.mrb[0].mxu0
      %v280 = vadd.f32 %v211, %v279
      %v281 = vpop.f32.mrb[0].mxu0
      %282 = vmatprep.mubr.f32.mxu0 0.0
      %283 = vmatmul.mubr.f32.gmra.mrb[0].mxu0 %v175
      %v284 = vpop.f32.mrb[0].mxu0
      %v285 = vadd.f32 %v211, %v284
      %v286 = vpop.f32.mrb[0].mxu0
      %287 = vmatprep.mubr.f32.mxu0 0.0
      %288 = vmatmul.mubr.f32.gmra.mrb[0].mxu0 %v176
      %v289 = vpop.f32.mrb[0].mxu0
      %v290 = vadd.f32 %v211, %v289
      %v291 = vpop.f32.mrb[0].mxu0
      %292 = vmatprep.mubr.f32.mxu0 0.0
      %293 = vmatmul.mubr.f32.gmra.mrb[0].mxu0 %v177
      %v294 = vpop.f32.mrb[0].mxu0
      %v295 = vadd.f32 %v211, %v294
      %v296 = vpop.f32.mrb[0].mxu0
      %297 = vmatprep.mubr.f32.mxu0 0.0
      %298 = vmatmul.mubr.f32.gmra.mrb[0].mxu0 %v178
      %v299 = vpop.f32.mrb[0].mxu0
      %v300 = vadd.f32 %v211, %v299
      %v301 = vpop.f32.mrb[0].mxu0
      %302 = vmatprep.mubr.f32.mxu0 0.0
      %303 = vmatmul.mubr.f32.gmra.mrb[0].mxu0 %v179
      %v304 = vpop.f32.mrb[0].mxu0
      %v305 = vadd.f32 %v211, %v304
      %v306 = vpop.f32.mrb[0].mxu0
      %307 = vmatprep.mubr.f32.mxu0 0.0
      %308 = vmatmul.mubr.f32.gmra.mrb[0].mxu0 %v180
      %v309 = vpop.f32.mrb[0].mxu0
      %v310 = vadd.f32 %v211, %v309
      %v311 = vpop.f32.mrb[0].mxu0
      %312 = vmatprep.mubr.f32.mxu0 0.0
      %313 = vmatmul.mubr.f32.gmra.mrb[0].mxu0 %v181
      %v314 = vpop.f32.mrb[0].mxu0
      %v315 = vadd.f32 %v211, %v314
      %v316 = vpop.f32.mrb[0].mxu0
      %317 = vmatprep.mubr.f32.mxu0 0.0
      %318 = vmatmul.mubr.f32.gmra.mrb[0].mxu0 %v182
      %v319 = vpop.f32.mrb[0].mxu0
      %v320 = vadd.f32 %v211, %v319
      %v321 = vpop.f32.mrb[0].mxu0
      %322 = vmatprep.mubr.f32.mxu0 0.0
      %323 = vmatmul.mubr.f32.gmra.mrb[0].mxu0 %v183
      %v324 = vpop.f32.mrb[0].mxu0
      %v325 = vadd.f32 %v211, %v324
      %v326 = vpop.f32.mrb[0].mxu0
      %327 = vmatprep.mubr.f32.mxu0 0.0
      %328 = vmatmul.mubr.f32.gmra.mrb[0].mxu0 %v184
      %v329 = vpop.f32.mrb[0].mxu0
      %v330 = vadd.f32 %v211, %v329
      %v331 = vpop.f32.mrb[0].mxu0
      %332 = vmatprep.mubr.f32.mxu0 0.0
      %333 = vmatmul.mubr.f32.gmra.mrb[0].mxu0 %v185
      %v334 = vpop.f32.mrb[0].mxu0
      %v335 = vadd.f32 %v211, %v334
      %v336 = vpop.f32.mrb[0].mxu0
      %337 = vmatprep.mubr.f32.mxu0 0.0
      %338 = vmatmul.mubr.f32.gmra.mrb[0].mxu0 %v186
      %v339 = vpop.f32.mrb[0].mxu0
      %v340 = vadd.f32 %v211, %v339
      %v341 = vpop.f32.mrb[0].mxu0
      %342 = vmatprep.mubr.f32.mxu0 0.0
      %343 = vmatmul.mubr.f32.gmra.mrb[0].mxu0 %v187
      %v344 = vpop.f32.mrb[0].mxu0
      %v345 = vadd.f32 %v211, %v344
      %v346 = vpop.f32.mrb[0].mxu0
      %347 = vmatprep.mubr.f32.mxu0 0.0
      %348 = vmatmul.mubr.f32.gmra.mrb[0].mxu0 %v188
      %v349 = vpop.f32.mrb[0].mxu0
      %v350 = vadd.f32 %v211, %v349
      %v351 = vpop.f32.mrb[0].mxu0
      %352 = vmatprep.mubr.f32.mxu0 0.0
      %353 = vmatmul.mubr.f32.gmra.mrb[0].mxu0 %v189
      %v354 = vpop.f32.mrb[0].mxu0
      %v355 = vadd.f32 %v211, %v354
      %v356 = vpop.f32.mrb[0].mxu0
      %357 = vdwg.mxu0
      %v358 = vmax.f32 %v280, 0.0
      %v359 = vmax.f32 %v285, 0.0
      %v360 = vmax.f32 %v290, 0.0
      %v361 = vmax.f32 %v295, 0.0
      %v362 = vmax.f32 %v300, 0.0
      %v363 = vmax.f32 %v305, 0.0
      %v364 = vmax.f32 %v310, 0.0
      %v365 = vmax.f32 %v315, 0.0
      %v366 = vmax.f32 %v320, 0.0
      %v367 = vmax.f32 %v325, 0.0
      %v368 = vmax.f32 %v330, 0.0
      %v369 = vmax.f32 %v335, 0.0
      %v370 = vmax.f32 %v340, 0.0
      %v371 = vmax.f32 %v345, 0.0
      %v372 = vmax.f32 %v350, 0.0
      %v373 = vmax.f32 %v355, 0.0
      %s374 = scalar_lea.vmem %s1, 128
      %v375 = vld [vmem:[%s374] sm:$0xff]
      %v376 = vld [vmem:[%s374 + $0x8] sm:$0xff]
      %v377 = vld [vmem:[%s374 + $0x10] sm:$0xff]
      %v378 = vld [vmem:[%s374 + $0x18] sm:$0xff]
      %v379 = vld [vmem:[%s374 + $0x20] sm:$0xff]
      %v380 = vld [vmem:[%s374 + $0x28] sm:$0xff]
      %v381 = vld [vmem:[%s374 + $0x30] sm:$0xff]
      %v382 = vld [vmem:[%s374 + $0x38] sm:$0xff]
      %v383 = vld [vmem:[%s374 + $0x40] sm:$0xff]
      %v384 = vld [vmem:[%s374 + $0x48] sm:$0xff]
      %v385 = vld [vmem:[%s374 + $0x50] sm:$0xff]
      %v386 = vld [vmem:[%s374 + $0x58] sm:$0xff]
      %v387 = vld [vmem:[%s374 + $0x60] sm:$0xff]
      %v388 = vld [vmem:[%s374 + $0x68] sm:$0xff]
      %v389 = vld [vmem:[%s374 + $0x70] sm:$0xff]
      %v390 = vld [vmem:[%s374 + $0x78] sm:$0xff]
      %s391 = scalar_lea.vmem %s2, 1
      %v392 = vld [vmem:[%s391] sm:$0x1]
      %v394 = vlaneseq
      %v395 = vshrl.u32 %v394, 7
      %v396 = vsub.s32 0, %v395
      %v397 = vrot.slane %v392, %v396
      %399 = vmatprep.subr.mxu0 0.0
      %400 = vmatpush1.msra.mxu0 %v375
      %401 = vmatprep.subr.mxu0 0.0
      %402 = vmatpush1.msra.mxu0 %v376
      %403 = vmatprep.subr.mxu0 0.0
      %404 = vmatpush1.msra.mxu0 %v377
      %405 = vmatprep.subr.mxu0 0.0
      %406 = vmatpush1.msra.mxu0 %v378
      %407 = vmatprep.subr.mxu0 0.0
      %408 = vmatpush1.msra.mxu0 %v379
      %409 = vmatprep.subr.mxu0 0.0
      %410 = vmatpush1.msra.mxu0 %v380
      %411 = vmatprep.subr.mxu0 0.0
      %412 = vmatpush1.msra.mxu0 %v381
      %413 = vmatprep.subr.mxu0 0.0
      %414 = vmatpush1.msra.mxu0 %v382
      %415 = vmatprep.subr.mxu0 0.0
      %416 = vmatpush1.msra.mxu0 %v383
      %417 = vmatprep.subr.mxu0 0.0
      %418 = vmatpush1.msra.mxu0 %v384
      %419 = vmatprep.subr.mxu0 0.0
      %420 = vmatpush1.msra.mxu0 %v385
      %421 = vmatprep.subr.mxu0 0.0
      %422 = vmatpush1.msra.mxu0 %v386
      %423 = vmatprep.subr.mxu0 0.0
      %424 = vmatpush1.msra.mxu0 %v387
      %425 = vmatprep.subr.mxu0 0.0
      %426 = vmatpush1.msra.mxu0 %v388
      %427 = vmatprep.subr.mxu0 0.0
      %428 = vmatpush1.msra.mxu0 %v389
      %429 = vmatprep.subr.mxu0 0.0
      %430 = vmatpush1.msra.mxu0 %v390
      %431 = vmatprep.subr.mxu0 0.0
      %432 = vmatpush1.msra.mxu0 0.0
      %433 = vmatprep.subr.mxu0 0.0
      %434 = vmatpush1.msra.mxu0 0.0
      %435 = vmatprep.subr.mxu0 0.0
      %436 = vmatpush1.msra.mxu0 0.0
      %437 = vmatprep.subr.mxu0 0.0
      %438 = vmatpush1.msra.mxu0 0.0
      %439 = vmatprep.subr.mxu0 0.0
      %440 = vmatpush1.msra.mxu0 0.0
      %441 = vmatprep.subr.mxu0 0.0
      %442 = vmatpush1.msra.mxu0 0.0
      %443 = vmatprep.subr.mxu0 0.0
      %444 = vmatpush1.msra.mxu0 0.0
      %445 = vmatprep.subr.mxu0 0.0
      %446 = vmatpush1.msra.mxu0 0.0
      %447 = vmatprep.subr.mxu0 0.0
      %448 = vmatpush1.msra.mxu0 0.0
      %449 = vmatprep.subr.mxu0 0.0
      %450 = vmatpush1.msra.mxu0 0.0
      %451 = vmatprep.subr.mxu0 0.0
      %452 = vmatpush1.msra.mxu0 0.0
      %453 = vmatprep.subr.mxu0 0.0
      %454 = vmatpush1.msra.mxu0 0.0
      %455 = vmatprep.subr.mxu0 0.0
      %456 = vmatpush1.msra.mxu0 0.0
      %457 = vmatprep.subr.mxu0 0.0
      %458 = vmatpush1.msra.mxu0 0.0
      %459 = vmatprep.subr.mxu0 0.0
      %460 = vmatpush1.msra.mxu0 0.0
      %461 = vmatprep.subr.mxu0 0.0
      %462 = vmatpush1.msra.mxu0 0.0
      %463 = vmatprep.mubr.f32.mxu0 0.0
      %464 = vmatmul.mubr.f32.gmra.mrb[0].mxu0 %v358
      %v465 = vpop.f32.mrb[0].mxu0
      %v466 = vadd.f32 %v397, %v465
      %v467 = vpop.f32.mrb[0].mxu0
      %468 = vmatprep.mubr.f32.mxu0 0.0
      %469 = vmatmul.mubr.f32.gmra.mrb[0].mxu0 %v359
      %v470 = vpop.f32.mrb[0].mxu0
      %v471 = vadd.f32 %v397, %v470
      %v472 = vpop.f32.mrb[0].mxu0
      %473 = vmatprep.mubr.f32.mxu0 0.0
      %474 = vmatmul.mubr.f32.gmra.mrb[0].mxu0 %v360
      %v475 = vpop.f32.mrb[0].mxu0
      %v476 = vadd.f32 %v397, %v475
      %v477 = vpop.f32.mrb[0].mxu0
      %478 = vmatprep.mubr.f32.mxu0 0.0
      %479 = vmatmul.mubr.f32.gmra.mrb[0].mxu0 %v361
      %v480 = vpop.f32.mrb[0].mxu0
      %v481 = vadd.f32 %v397, %v480
      %v482 = vpop.f32.mrb[0].mxu0
      %483 = vmatprep.mubr.f32.mxu0 0.0
      %484 = vmatmul.mubr.f32.gmra.mrb[0].mxu0 %v362
      %v485 = vpop.f32.mrb[0].mxu0
      %v486 = vadd.f32 %v397, %v485
      %v487 = vpop.f32.mrb[0].mxu0
      %488 = vmatprep.mubr.f32.mxu0 0.0
      %489 = vmatmul.mubr.f32.gmra.mrb[0].mxu0 %v363
      %v490 = vpop.f32.mrb[0].mxu0
      %v491 = vadd.f32 %v397, %v490
      %v492 = vpop.f32.mrb[0].mxu0
      %493 = vmatprep.mubr.f32.mxu0 0.0
      %494 = vmatmul.mubr.f32.gmra.mrb[0].mxu0 %v364
      %v495 = vpop.f32.mrb[0].mxu0
      %v496 = vadd.f32 %v397, %v495
      %v497 = vpop.f32.mrb[0].mxu0
      %498 = vmatprep.mubr.f32.mxu0 0.0
      %499 = vmatmul.mubr.f32.gmra.mrb[0].mxu0 %v365
      %v500 = vpop.f32.mrb[0].mxu0
      %v501 = vadd.f32 %v397, %v500
      %v502 = vpop.f32.mrb[0].mxu0
      %503 = vmatprep.mubr.f32.mxu0 0.0
      %504 = vmatmul.mubr.f32.gmra.mrb[0].mxu0 %v366
      %v505 = vpop.f32.mrb[0].mxu0
      %v506 = vadd.f32 %v397, %v505
      %v507 = vpop.f32.mrb[0].mxu0
      %508 = vmatprep.mubr.f32.mxu0 0.0
      %509 = vmatmul.mubr.f32.gmra.mrb[0].mxu0 %v367
      %v510 = vpop.f32.mrb[0].mxu0
      %v511 = vadd.f32 %v397, %v510
      %v512 = vpop.f32.mrb[0].mxu0
      %513 = vmatprep.mubr.f32.mxu0 0.0
      %514 = vmatmul.mubr.f32.gmra.mrb[0].mxu0 %v368
      %v515 = vpop.f32.mrb[0].mxu0
      %v516 = vadd.f32 %v397, %v515
      %v517 = vpop.f32.mrb[0].mxu0
      %518 = vmatprep.mubr.f32.mxu0 0.0
      %519 = vmatmul.mubr.f32.gmra.mrb[0].mxu0 %v369
      %v520 = vpop.f32.mrb[0].mxu0
      %v521 = vadd.f32 %v397, %v520
      %v522 = vpop.f32.mrb[0].mxu0
      %523 = vmatprep.mubr.f32.mxu0 0.0
      %524 = vmatmul.mubr.f32.gmra.mrb[0].mxu0 %v370
      %v525 = vpop.f32.mrb[0].mxu0
      %v526 = vadd.f32 %v397, %v525
      %v527 = vpop.f32.mrb[0].mxu0
      %528 = vmatprep.mubr.f32.mxu0 0.0
      %529 = vmatmul.mubr.f32.gmra.mrb[0].mxu0 %v371
      %v530 = vpop.f32.mrb[0].mxu0
      %v531 = vadd.f32 %v397, %v530
      %v532 = vpop.f32.mrb[0].mxu0
      %533 = vmatprep.mubr.f32.mxu0 0.0
      %534 = vmatmul.mubr.f32.gmra.mrb[0].mxu0 %v372
      %v535 = vpop.f32.mrb[0].mxu0
      %v536 = vadd.f32 %v397, %v535
      %v537 = vpop.f32.mrb[0].mxu0
      %538 = vmatprep.mubr.f32.mxu0 0.0
      %539 = vmatmul.mubr.f32.gmra.mrb[0].mxu0 %v373
      %v540 = vpop.f32.mrb[0].mxu0
      %v541 = vadd.f32 %v397, %v540
      %v542 = vpop.f32.mrb[0].mxu0
      %543 = vdwg.mxu0
      %v544 = vmax.f32 %v466, 0.0
      %v545 = vmax.f32 %v471, 0.0
      %v546 = vmax.f32 %v476, 0.0
      %v547 = vmax.f32 %v481, 0.0
      %v548 = vmax.f32 %v486, 0.0
      %v549 = vmax.f32 %v491, 0.0
      %v550 = vmax.f32 %v496, 0.0
      %v551 = vmax.f32 %v501, 0.0
      %v552 = vmax.f32 %v506, 0.0
      %v553 = vmax.f32 %v511, 0.0
      %v554 = vmax.f32 %v516, 0.0
      %v555 = vmax.f32 %v521, 0.0
      %v556 = vmax.f32 %v526, 0.0
      %v557 = vmax.f32 %v531, 0.0
      %v558 = vmax.f32 %v536, 0.0
      %v559 = vmax.f32 %v541, 0.0
      %s560 = scalar_lea.vmem %s1, 256
      %v561 = vld [vmem:[%s560] sm:$0xff]
      %v562 = vld [vmem:[%s560 + $0x8] sm:$0xff]
      %v563 = vld [vmem:[%s560 + $0x10] sm:$0xff]
      %v564 = vld [vmem:[%s560 + $0x18] sm:$0xff]
      %v565 = vld [vmem:[%s560 + $0x20] sm:$0xff]
      %v566 = vld [vmem:[%s560 + $0x28] sm:$0xff]
      %v567 = vld [vmem:[%s560 + $0x30] sm:$0xff]
      %v568 = vld [vmem:[%s560 + $0x38] sm:$0xff]
      %v569 = vld [vmem:[%s560 + $0x40] sm:$0xff]
      %v570 = vld [vmem:[%s560 + $0x48] sm:$0xff]
      %v571 = vld [vmem:[%s560 + $0x50] sm:$0xff]
      %v572 = vld [vmem:[%s560 + $0x58] sm:$0xff]
      %v573 = vld [vmem:[%s560 + $0x60] sm:$0xff]
      %v574 = vld [vmem:[%s560 + $0x68] sm:$0xff]
      %v575 = vld [vmem:[%s560 + $0x70] sm:$0xff]
      %v576 = vld [vmem:[%s560 + $0x78] sm:$0xff]
      %s577 = scalar_lea.vmem %s2, 2
      %v578 = vld [vmem:[%s577] sm:$0x1]
      %v580 = vlaneseq
      %v581 = vshrl.u32 %v580, 7
      %v582 = vsub.s32 0, %v581
      %v583 = vrot.slane %v578, %v582
      %585 = vmatprep.subr.mxu0 0.0
      %586 = vmatpush1.msra.mxu0 %v561
      %587 = vmatprep.subr.mxu0 0.0
      %588 = vmatpush1.msra.mxu0 %v562
      %589 = vmatprep.subr.mxu0 0.0
      %590 = vmatpush1.msra.mxu0 %v563
      %591 = vmatprep.subr.mxu0 0.0
      %592 = vmatpush1.msra.mxu0 %v564
      %593 = vmatprep.subr.mxu0 0.0
      %594 = vmatpush1.msra.mxu0 %v565
      %595 = vmatprep.subr.mxu0 0.0
      %596 = vmatpush1.msra.mxu0 %v566
      %597 = vmatprep.subr.mxu0 0.0
      %598 = vmatpush1.msra.mxu0 %v567
      %599 = vmatprep.subr.mxu0 0.0
      %600 = vmatpush1.msra.mxu0 %v568
      %601 = vmatprep.subr.mxu0 0.0
      %602 = vmatpush1.msra.mxu0 %v569
      %603 = vmatprep.subr.mxu0 0.0
      %604 = vmatpush1.msra.mxu0 %v570
      %605 = vmatprep.subr.mxu0 0.0
      %606 = vmatpush1.msra.mxu0 %v571
      %607 = vmatprep.subr.mxu0 0.0
      %608 = vmatpush1.msra.mxu0 %v572
      %609 = vmatprep.subr.mxu0 0.0
      %610 = vmatpush1.msra.mxu0 %v573
      %611 = vmatprep.subr.mxu0 0.0
      %612 = vmatpush1.msra.mxu0 %v574
      %613 = vmatprep.subr.mxu0 0.0
      %614 = vmatpush1.msra.mxu0 %v575
      %615 = vmatprep.subr.mxu0 0.0
      %616 = vmatpush1.msra.mxu0 %v576
      %617 = vmatprep.subr.mxu0 0.0
      %618 = vmatpush1.msra.mxu0 0.0
      %619 = vmatprep.subr.mxu0 0.0
      %620 = vmatpush1.msra.mxu0 0.0
      %621 = vmatprep.subr.mxu0 0.0
      %622 = vmatpush1.msra.mxu0 0.0
      %623 = vmatprep.subr.mxu0 0.0
      %624 = vmatpush1.msra.mxu0 0.0
      %625 = vmatprep.subr.mxu0 0.0
      %626 = vmatpush1.msra.mxu0 0.0
      %627 = vmatprep.subr.mxu0 0.0
      %628 = vmatpush1.msra.mxu0 0.0
      %629 = vmatprep.subr.mxu0 0.0
      %630 = vmatpush1.msra.mxu0 0.0
      %631 = vmatprep.subr.mxu0 0.0
      %632 = vmatpush1.msra.mxu0 0.0
      %633 = vmatprep.subr.mxu0 0.0
      %634 = vmatpush1.msra.mxu0 0.0
      %635 = vmatprep.subr.mxu0 0.0
      %636 = vmatpush1.msra.mxu0 0.0
      %637 = vmatprep.subr.mxu0 0.0
      %638 = vmatpush1.msra.mxu0 0.0
      %639 = vmatprep.subr.mxu0 0.0
      %640 = vmatpush1.msra.mxu0 0.0
      %641 = vmatprep.subr.mxu0 0.0
      %642 = vmatpush1.msra.mxu0 0.0
      %643 = vmatprep.subr.mxu0 0.0
      %644 = vmatpush1.msra.mxu0 0.0
      %645 = vmatprep.subr.mxu0 0.0
      %646 = vmatpush1.msra.mxu0 0.0
      %647 = vmatprep.subr.mxu0 0.0
      %648 = vmatpush1.msra.mxu0 0.0
      %649 = vmatprep.mubr.f32.mxu0 0.0
      %650 = vmatmul.mubr.f32.gmra.mrb[0].mxu0 %v544
      %v651 = vpop.f32.mrb[0].mxu0
      %v652 = vadd.f32 %v583, %v651
      %v653 = vpop.f32.mrb[0].mxu0
      %654 = vmatprep.mubr.f32.mxu0 0.0
      %655 = vmatmul.mubr.f32.gmra.mrb[0].mxu0 %v545
      %v656 = vpop.f32.mrb[0].mxu0
      %v657 = vadd.f32 %v583, %v656
      %v658 = vpop.f32.mrb[0].mxu0
      %659 = vmatprep.mubr.f32.mxu0 0.0
      %660 = vmatmul.mubr.f32.gmra.mrb[0].mxu0 %v546
      %v661 = vpop.f32.mrb[0].mxu0
      %v662 = vadd.f32 %v583, %v661
      %v663 = vpop.f32.mrb[0].mxu0
      %664 = vmatprep.mubr.f32.mxu0 0.0
      %665 = vmatmul.mubr.f32.gmra.mrb[0].mxu0 %v547
      %v666 = vpop.f32.mrb[0].mxu0
      %v667 = vadd.f32 %v583, %v666
      %v668 = vpop.f32.mrb[0].mxu0
      %669 = vmatprep.mubr.f32.mxu0 0.0
      %670 = vmatmul.mubr.f32.gmra.mrb[0].mxu0 %v548
      %v671 = vpop.f32.mrb[0].mxu0
      %v672 = vadd.f32 %v583, %v671
      %v673 = vpop.f32.mrb[0].mxu0
      %674 = vmatprep.mubr.f32.mxu0 0.0
      %675 = vmatmul.mubr.f32.gmra.mrb[0].mxu0 %v549
      %v676 = vpop.f32.mrb[0].mxu0
      %v677 = vadd.f32 %v583, %v676
      %v678 = vpop.f32.mrb[0].mxu0
      %679 = vmatprep.mubr.f32.mxu0 0.0
      %680 = vmatmul.mubr.f32.gmra.mrb[0].mxu0 %v550
      %v681 = vpop.f32.mrb[0].mxu0
      %v682 = vadd.f32 %v583, %v681
      %v683 = vpop.f32.mrb[0].mxu0
      %684 = vmatprep.mubr.f32.mxu0 0.0
      %685 = vmatmul.mubr.f32.gmra.mrb[0].mxu0 %v551
      %v686 = vpop.f32.mrb[0].mxu0
      %v687 = vadd.f32 %v583, %v686
      %v688 = vpop.f32.mrb[0].mxu0
      %689 = vmatprep.mubr.f32.mxu0 0.0
      %690 = vmatmul.mubr.f32.gmra.mrb[0].mxu0 %v552
      %v691 = vpop.f32.mrb[0].mxu0
      %v692 = vadd.f32 %v583, %v691
      %v693 = vpop.f32.mrb[0].mxu0
      %694 = vmatprep.mubr.f32.mxu0 0.0
      %695 = vmatmul.mubr.f32.gmra.mrb[0].mxu0 %v553
      %v696 = vpop.f32.mrb[0].mxu0
      %v697 = vadd.f32 %v583, %v696
      %v698 = vpop.f32.mrb[0].mxu0
      %699 = vmatprep.mubr.f32.mxu0 0.0
      %700 = vmatmul.mubr.f32.gmra.mrb[0].mxu0 %v554
      %v701 = vpop.f32.mrb[0].mxu0
      %v702 = vadd.f32 %v583, %v701
      %v703 = vpop.f32.mrb[0].mxu0
      %704 = vmatprep.mubr.f32.mxu0 0.0
      %705 = vmatmul.mubr.f32.gmra.mrb[0].mxu0 %v555
      %v706 = vpop.f32.mrb[0].mxu0
      %v707 = vadd.f32 %v583, %v706
      %v708 = vpop.f32.mrb[0].mxu0
      %709 = vmatprep.mubr.f32.mxu0 0.0
      %710 = vmatmul.mubr.f32.gmra.mrb[0].mxu0 %v556
      %v711 = vpop.f32.mrb[0].mxu0
      %v712 = vadd.f32 %v583, %v711
      %v713 = vpop.f32.mrb[0].mxu0
      %714 = vmatprep.mubr.f32.mxu0 0.0
      %715 = vmatmul.mubr.f32.gmra.mrb[0].mxu0 %v557
      %v716 = vpop.f32.mrb[0].mxu0
      %v717 = vadd.f32 %v583, %v716
      %v718 = vpop.f32.mrb[0].mxu0
      %719 = vmatprep.mubr.f32.mxu0 0.0
      %720 = vmatmul.mubr.f32.gmra.mrb[0].mxu0 %v558
      %v721 = vpop.f32.mrb[0].mxu0
      %v722 = vadd.f32 %v583, %v721
      %v723 = vpop.f32.mrb[0].mxu0
      %724 = vmatprep.mubr.f32.mxu0 0.0
      %725 = vmatmul.mubr.f32.gmra.mrb[0].mxu0 %v559
      %v726 = vpop.f32.mrb[0].mxu0
      %v727 = vadd.f32 %v583, %v726
      %v728 = vpop.f32.mrb[0].mxu0
      %729 = vdwg.mxu0
      %v730 = vmax.f32 %v652, 0.0
      %v731 = vmax.f32 %v657, 0.0
      %v732 = vmax.f32 %v662, 0.0
      %v733 = vmax.f32 %v667, 0.0
      %v734 = vmax.f32 %v672, 0.0
      %v735 = vmax.f32 %v677, 0.0
      %v736 = vmax.f32 %v682, 0.0
      %v737 = vmax.f32 %v687, 0.0
      %v738 = vmax.f32 %v692, 0.0
      %v739 = vmax.f32 %v697, 0.0
      %v740 = vmax.f32 %v702, 0.0
      %v741 = vmax.f32 %v707, 0.0
      %v742 = vmax.f32 %v712, 0.0
      %v743 = vmax.f32 %v717, 0.0
      %v744 = vmax.f32 %v722, 0.0
      %v745 = vmax.f32 %v727, 0.0
      %746 = vst [vmem:[%s172] sm:$0xff] %v730
      %747 = vst [vmem:[%s172 + $0x8] sm:$0xff] %v731
      %748 = vst [vmem:[%s172 + $0x10] sm:$0xff] %v732
      %749 = vst [vmem:[%s172 + $0x18] sm:$0xff] %v733
      %750 = vst [vmem:[%s172 + $0x20] sm:$0xff] %v734
      %751 = vst [vmem:[%s172 + $0x28] sm:$0xff] %v735
      %752 = vst [vmem:[%s172 + $0x30] sm:$0xff] %v736
      %753 = vst [vmem:[%s172 + $0x38] sm:$0xff] %v737
      %754 = vst [vmem:[%s172 + $0x40] sm:$0xff] %v738
      %755 = vst [vmem:[%s172 + $0x48] sm:$0xff] %v739
      %756 = vst [vmem:[%s172 + $0x50] sm:$0xff] %v740
      %757 = vst [vmem:[%s172 + $0x58] sm:$0xff] %v741
      %758 = vst [vmem:[%s172 + $0x60] sm:$0xff] %v742
      %759 = vst [vmem:[%s172 + $0x68] sm:$0xff] %v743
      %760 = vst [vmem:[%s172 + $0x70] sm:$0xff] %v744
      %761 = vst [vmem:[%s172 + $0x78] sm:$0xff] %v745
      %s762 = smul.u32 16, %s14
      %p763 = scmp.lt.s32.totalorder %s762, 31
      %s764 = scalar_select %p763, %s762, 31
      %s765 = smul.addr %s764, 8
      %s766 = scalar_lea.vmem %s3, %s765
      // Predicated region
      $region33: #{black_box_node_forward.1} parent=31 // pred_check
        %p767 = pneg %p100
      $region34: #{black_box_node_forward.1} parent=31 // pred_check_branch
        %769 = sbr.rel (%p767) target = $region36
      $region35: #{black_box_node_forward.1} parent=31 // pred_region
        %s770 = smul.u32 16, %s14
      $region36: #{black_box_node_forward.1} parent=31 // pred_fallthru
        _
    $region32: #{black_box_node_forward.1} parent=5 // pred_fallthru
      _
    %p771 = scmp.le.s32.totalorder 2, %s9
    // Predicated region
    $region37: #{black_box_node_forward.1} parent=5 // pred_check
      %p772 = pneg %p771
    $region38: #{black_box_node_forward.1} parent=5 // pred_check_branch
      %774 = sbr.rel (%p772) target = $region40
    $region39: #{black_box_node_forward.1} parent=5 // pred_region
      %s775 = ssub.s32 %s9, 2
      // Predicated region
      $region41: #{black_box_node_forward.1} parent=39 // pred_check
        %p776 = pneg %p106
      $region42: #{black_box_node_forward.1} parent=39 // pred_check_branch
        %778 = sbr.rel (%p776) target = $region44
      $region43: #{black_box_node_forward.1} parent=39 // pred_region
        %s779 = smul.u32 16, %s15
        %p780 = scmp.lt.s32.totalorder %s779, 31
        %s781 = scalar_select %p780, %s779, 31
        %s782 = smul.addr %s781, 8
        %s783 = scalar_lea.vmem %s3, %s782
      $region44: #{black_box_node_forward.1} parent=39 // pred_fallthru
        _
    $region40: #{black_box_node_forward.1} parent=5 // pred_fallthru
      _
  $region6: #{black_box_node_forward.1} parent=0 // loop_footer
    %s13 = sadd.s32 1, %s9
  $region7: #{black_box_node_forward.1} parent=0 // loop_footer_branch
    %8 = sbr.rel target = $region3
  $region8: #{black_box_node_forward.1} parent=0 // loop_exit
    _

</llo_original>
